<compile_context>
chip_gen: v5e
topology: v5e:2x2
jax: 0.10.0
libtpu: 0.0.40
codegen_flags: <defaults>
</compile_context>

<pallas_src>
import jax
import jax.numpy as jnp
from jax.experimental import pallas as pl
from jax.experimental.pallas import tpu as pltpu


def gennet_kernel(x_ref, w1t_ref, b1_ref, w2_ref, b2_ref, o_ref, acc_y, acc_z):
    j = pl.program_id(1)            # OUT (gene) tile -> pathway reduction axis
    k = pl.program_id(2)            # IN  (SNP) tile  -> snp-layer contraction axis
    nj = pl.num_programs(1)
    nk = pl.num_programs(2)

    @pl.when(jnp.logical_and(j == 0, k == 0))
    def _():
        acc_z[...] = jnp.zeros_like(acc_z)

    @pl.when(k == 0)
    def _():
        acc_y[...] = jnp.zeros_like(acc_y)

    # snp layer partial product on the MXU, f32 accumulation.
    acc_y[...] += jnp.dot(x_ref[...], w1t_ref[...],
                          preferred_element_type=jnp.float32)

    @pl.when(k == nk - 1)
    def _():
        # Bias + ReLU in f32 on the VPU, then the pathway layer as a
        # broadcast-multiply + lane reduction (an N=1 MXU matmul would waste
        # >99% of the systolic array and pay a second pipeline fill).
        y = jnp.maximum(acc_y[...] + b1_ref[...], 0.0)               # (tb, tn)
        acc_z[...] += jnp.sum(y * w2_ref[...], axis=-1, keepdims=True)

    @pl.when(jnp.logical_and(j == nj - 1, k == nk - 1))
    def _():
        z = acc_z[...] + b2_ref[0, 0]                                # SMEM scalar
        o_ref[...] = jnp.maximum(z, 0.0).astype(o_ref.dtype)


def _pick_tile(dim, target, align):
    """Largest tile <= target that divides `dim` and is a multiple of `align`,
    otherwise the full dim (block == full array dim is always legal)."""
    if dim <= target:
        return dim
    t = (target // align) * align
    while t >= align:
        if dim % t == 0:
            return t
        t -= align
    return dim


def gennet_forward(x, w1, mask_T, b1, w2, b2, *,
                   compute_dtype=jnp.bfloat16,
                   tb=256, tn=512, tk=512,
                   vmem_limit_bytes=48 * 1024 * 1024):
    """x: (B, IN) f32. w1/mask_T: (OUT, IN). b1: (OUT,). w2: (OUT,1)|(1,OUT).
    b2: (1,). Returns (B, 1) f32."""
    B, IN = x.shape
    OUT = w1.shape[0]

    # Fold the constant sparse mask into the weight once (outside the kernel)
    # and pre-transpose to (IN, OUT): MXU-preferred layout, no mask DMA.
    w1m_t = (w1 * mask_T).T.astype(compute_dtype)            # (IN, OUT)
    x_c = x.astype(compute_dtype)
    b1_r = b1.reshape(1, OUT).astype(jnp.float32)            # (1, OUT)
    w2_r = w2.reshape(1, OUT).astype(jnp.float32)            # (1, OUT)
    b2_r = b2.reshape(1, 1).astype(jnp.float32)              # (1, 1) -> SMEM

    b_align = 8 if jnp.dtype(compute_dtype) == jnp.dtype(jnp.float32) else 16
    tb = _pick_tile(B, tb, b_align)
    tn = _pick_tile(OUT, tn, 128)
    tk = _pick_tile(IN, tk, 128)
    grid = (B // tb, OUT // tn, IN // tk)

    kernel = pl.pallas_call(
        gennet_kernel,
        out_shape=jax.ShapeDtypeStruct((B, 1), jnp.float32),
        grid_spec=pltpu.PrefetchScalarGridSpec(
            num_scalar_prefetch=0,
            grid=grid,
            in_specs=[
                pl.BlockSpec((tb, tk), lambda i, j, k: (i, k)),     # x tile
                pl.BlockSpec((tk, tn), lambda i, j, k: (k, j)),     # (w1*mask).T
                pl.BlockSpec((1, tn), lambda i, j, k: (0, j)),      # b1 row
                pl.BlockSpec((1, tn), lambda i, j, k: (0, j)),      # w2 row
                pl.BlockSpec(memory_space=pltpu.MemorySpace.SMEM),  # b2 scalar
            ],
            out_specs=pl.BlockSpec((tb, 1), lambda i, j, k: (i, 0)),
            scratch_shapes=[
                pltpu.VMEM((tb, tn), jnp.float32),   # snp-layer accumulator
                pltpu.VMEM((tb, 1), jnp.float32),    # pathway accumulator
            ],
        ),
        compiler_params=pltpu.CompilerParams(
            dimension_semantics=("parallel", "arbitrary", "arbitrary"),
            vmem_limit_bytes=vmem_limit_bytes,
        ),
    )
    return kernel(x_c, w1m_t, b1_r, w2_r, b2_r)


def reference_forward(x, w1, mask_T, b1, w2, b2):
    """Pure-jnp f32 reference matching the PyTorch module."""
    y = jnp.maximum(x @ (w1 * mask_T).T + b1, 0.0)
    return jnp.maximum(y @ w2.reshape(-1, 1) + b2.reshape(1, 1), 0.0)


def reference_forward_cast(x, w1, mask_T, b1, w2, b2, dtype):
    """Reference with the same operand cast the kernel uses (narrow matmul
    operands, f32 accumulation / elementwise math)."""
    w1m_t = (w1 * mask_T).T.astype(dtype)
    y = jnp.dot(x.astype(dtype), w1m_t, preferred_element_type=jnp.float32)
    y = jnp.maximum(y + b1.reshape(1, -1), 0.0)
    z = jnp.sum(y * w2.reshape(1, -1), axis=-1, keepdims=True) + b2.reshape(1, 1)
    return jnp.maximum(z, 0.0)


if __name__ == "__main__":
    INPUT_SIZE = 256    # SNP features
    OUTPUT_SIZE = 256   # genes / pathway inputs
    BATCH = 8

    key = jax.random.PRNGKey(0)
    k_mask, k_w1, k_b1, k_w2, k_b2, k_x = jax.random.split(key, 6)

    # genes_mask: (input_size, output_size) 0/1; the module uses its transpose.
    genes_mask = (jax.random.uniform(k_mask, (INPUT_SIZE, OUTPUT_SIZE)) > 0.5
                  ).astype(jnp.float32)
    mask_T = genes_mask.T                                    # (OUT, IN)

    # torch.rand init for the sparse layer.
    w1 = jax.random.uniform(k_w1, (OUTPUT_SIZE, INPUT_SIZE), dtype=jnp.float32)
    b1 = jax.random.uniform(k_b1, (OUTPUT_SIZE,), dtype=jnp.float32)

    # nn.Linear(OUTPUT_SIZE, 1) init: U(-k, k), k = 1/sqrt(fan_in).
    bound = 1.0 / (OUTPUT_SIZE ** 0.5)
    w2 = jax.random.uniform(k_w2, (OUTPUT_SIZE, 1), dtype=jnp.float32,
                            minval=-bound, maxval=bound)
    b2 = jax.random.uniform(k_b2, (1,), dtype=jnp.float32,
                            minval=-bound, maxval=bound)

    x = jax.random.uniform(k_x, (BATCH, INPUT_SIZE), dtype=jnp.float32)

    ref = reference_forward(x, w1, mask_T, b1, w2, b2)

    # f32-operand path; small tiles so the grid is (1, 2, 2) and every pl.when
    # init/accumulate/finalize branch is exercised.
    out_f32 = jax.block_until_ready(
        gennet_forward(x, w1, mask_T, b1, w2, b2,
                       compute_dtype=jnp.float32, tb=8, tn=128, tk=128))
    assert out_f32.shape == (BATCH, 1)
    assert jnp.allclose(out_f32, ref, atol=1e-1, rtol=2e-2), (
        f"f32 path max err {jnp.max(jnp.abs(out_f32 - ref))}")

    # bf16 matmul operands / f32 accumulation (the fast path on v6e / v7x),
    # checked against a reference that applies the identical cast.
    out_bf16 = jax.block_until_ready(
        gennet_forward(x, w1, mask_T, b1, w2, b2,
                       compute_dtype=jnp.bfloat16, tb=8, tn=128, tk=128))
    ref_bf16 = reference_forward_cast(x, w1, mask_T, b1, w2, b2, jnp.bfloat16)
    assert jnp.allclose(out_bf16, ref_bf16, atol=1e-3, rtol=1e-3), (
        f"bf16 path max err {jnp.max(jnp.abs(out_bf16 - ref_bf16))}")

    print("KERNEL_OK")
</pallas_src>

<mosaic_0001>
module attributes {stable_mosaic.version = 11 : i64} {
  func.func @gennet_kernel(%arg0: i32, %arg1: i32, %arg2: i32, %arg3: memref<8x128xf32, #tpu.memory_space<vmem>>, %arg4: memref<128x128xf32, #tpu.memory_space<vmem>>, %arg5: memref<1x128xf32, #tpu.memory_space<vmem>>, %arg6: memref<1x128xf32, #tpu.memory_space<vmem>>, %arg7: memref<1x1xf32, #tpu.memory_space<smem>>, %arg8: memref<8x1xf32, #tpu.memory_space<vmem>>, %arg9: memref<8x128xf32, #tpu.memory_space<vmem>>, %arg10: memref<8x1xf32, #tpu.memory_space<vmem>>) attributes {dimension_semantics = [#tpu.dimension_semantics<parallel>, #tpu.dimension_semantics<arbitrary>, #tpu.dimension_semantics<arbitrary>], iteration_bounds = array<i64: 1, 2, 2>, scalar_prefetch = 0 : i64, scratch_operands = 2 : i64, tpu.core_type = #tpu.core_type<tc>, window_params = [{transform_indices = @transform_0, window_bounds = array<i64: 8, 128>}, {transform_indices = @transform_1, window_bounds = array<i64: 128, 128>}, {transform_indices = @transform_2, window_bounds = array<i64: 1, 128>}, {transform_indices = @transform_3, window_bounds = array<i64: 1, 128>}, {transform_indices = @transform_4, window_bounds = array<i64: 1, 1>}, {transform_indices = @transform_5, window_bounds = array<i64: 8, 1>}]} {
    %c0_i32 = arith.constant 0 : i32
    %0 = arith.cmpi eq, %arg1, %c0_i32 : i32
    %c0_i32_0 = arith.constant 0 : i32
    %1 = arith.cmpi eq, %arg2, %c0_i32_0 : i32
    %2 = arith.andi %0, %1 : i1
    %3 = arith.extui %2 : i1 to i32
    %c0_i32_1 = arith.constant 0 : i32
    %4 = arith.cmpi ne, %3, %c0_i32_1 : i32
    scf.if %4 {
      %cst_15 = arith.constant 0.000000e+00 : f32
      %22 = vector.broadcast %cst_15 : f32 to vector<8x1xf32>
      %c0_16 = arith.constant 0 : index
      %c0_17 = arith.constant 0 : index
      %23 = vector.load %arg10[%c0_16, %c0_17] : memref<8x1xf32, #tpu.memory_space<vmem>>, vector<8x1xf32>
      tpu.vector_store %arg10[%c0_16, %c0_17], %22 {strides = array<i32>} : memref<8x1xf32, #tpu.memory_space<vmem>>, vector<8x1xf32>,
    } else {
    }
    %c0_i32_2 = arith.constant 0 : i32
    %5 = arith.cmpi eq, %arg2, %c0_i32_2 : i32
    %6 = arith.extui %5 : i1 to i32
    %c0_i32_3 = arith.constant 0 : i32
    %7 = arith.cmpi ne, %6, %c0_i32_3 : i32
    scf.if %7 {
      %cst_15 = arith.constant 0.000000e+00 : f32
      %22 = vector.broadcast %cst_15 : f32 to vector<8x128xf32>
      %c0_16 = arith.constant 0 : index
      %c0_17 = arith.constant 0 : index
      %23 = vector.load %arg9[%c0_16, %c0_17] : memref<8x128xf32, #tpu.memory_space<vmem>>, vector<8x128xf32>
      tpu.vector_store %arg9[%c0_16, %c0_17], %22 {strides = array<i32>} : memref<8x128xf32, #tpu.memory_space<vmem>>, vector<8x128xf32>,
    } else {
    }
    %c0 = arith.constant 0 : index
    %c0_4 = arith.constant 0 : index
    %8 = vector.load %arg9[%c0, %c0_4] : memref<8x128xf32, #tpu.memory_space<vmem>>, vector<8x128xf32>
    %c0_5 = arith.constant 0 : index
    %c0_6 = arith.constant 0 : index
    %9 = vector.load %arg3[%c0_5, %c0_6] : memref<8x128xf32, #tpu.memory_space<vmem>>, vector<8x128xf32>
    %c0_7 = arith.constant 0 : index
    %c0_8 = arith.constant 0 : index
    %10 = vector.load %arg4[%c0_7, %c0_8] : memref<128x128xf32, #tpu.memory_space<vmem>>, vector<128x128xf32>
    %cst = arith.constant dense<0.000000e+00> : vector<8x128xf32>
    %11 = tpu.matmul %9, %10, %cst {dimension_numbers = #tpu.dot_dimension_numbers<[1], [0], [0], [1], [0, 0, 1, 1], [], []>} : vector<8x128xf32>, vector<128x128xf32>, vector<8x128xf32> -> vector<8x128xf32>
    %12 = arith.addf %8, %11 : vector<8x128xf32>
    %c0_9 = arith.constant 0 : index
    %c0_10 = arith.constant 0 : index
    %13 = vector.load %arg9[%c0_9, %c0_10] : memref<8x128xf32, #tpu.memory_space<vmem>>, vector<8x128xf32>
    tpu.vector_store %arg9[%c0_9, %c0_10], %12 {strides = array<i32>} : memref<8x128xf32, #tpu.memory_space<vmem>>, vector<8x128xf32>,
    %c1_i32 = arith.constant 1 : i32
    %14 = arith.cmpi eq, %arg2, %c1_i32 : i32
    %15 = arith.extui %14 : i1 to i32
    %c0_i32_11 = arith.constant 0 : i32
    %16 = arith.cmpi ne, %15, %c0_i32_11 : i32
    scf.if %16 {
      %c0_15 = arith.constant 0 : index
      %c0_16 = arith.constant 0 : index
      %22 = vector.load %arg9[%c0_15, %c0_16] : memref<8x128xf32, #tpu.memory_space<vmem>>, vector<8x128xf32>
      %c0_17 = arith.constant 0 : index
      %c0_18 = arith.constant 0 : index
      %23 = vector.load %arg5[%c0_17, %c0_18] : memref<1x128xf32, #tpu.memory_space<vmem>>, vector<1x128xf32>
      %24 = vector.broadcast %23 : vector<1x128xf32> to vector<8x128xf32>
      %25 = arith.addf %22, %24 : vector<8x128xf32>
      %cst_19 = arith.constant 0.000000e+00 : f32
      %26 = vector.broadcast %cst_19 : f32 to vector<8x128xf32>
      %27 = arith.maximumf %25, %26 : vector<8x128xf32>
      %c0_20 = arith.constant 0 : index
      %c0_21 = arith.constant 0 : index
      %28 = vector.load %arg10[%c0_20, %c0_21] : memref<8x1xf32, #tpu.memory_space<vmem>>, vector<8x1xf32>
      %c0_22 = arith.constant 0 : index
      %c0_23 = arith.constant 0 : index
      %29 = vector.load %arg6[%c0_22, %c0_23] : memref<1x128xf32, #tpu.memory_space<vmem>>, vector<1x128xf32>
      %30 = vector.broadcast %29 : vector<1x128xf32> to vector<8x128xf32>
      %31 = arith.mulf %27, %30 : vector<8x128xf32>
      %cst_24 = arith.constant dense<0.000000e+00> : vector<8xf32>
      %32 = vector.multi_reduction <add>, %31, %cst_24 [1] : vector<8x128xf32> to vector<8xf32>
      %33 = vector.shape_cast %32 : vector<8xf32> to vector<8x1xf32>
      %34 = arith.addf %28, %33 : vector<8x1xf32>
      %c0_25 = arith.constant 0 : index
      %c0_26 = arith.constant 0 : index
      %35 = vector.load %arg10[%c0_25, %c0_26] : memref<8x1xf32, #tpu.memory_space<vmem>>, vector<8x1xf32>
      tpu.vector_store %arg10[%c0_25, %c0_26], %34 {strides = array<i32>} : memref<8x1xf32, #tpu.memory_space<vmem>>, vector<8x1xf32>,
    } else {
    }
    %c1_i32_12 = arith.constant 1 : i32
    %17 = arith.cmpi eq, %arg1, %c1_i32_12 : i32
    %c1_i32_13 = arith.constant 1 : i32
    %18 = arith.cmpi eq, %arg2, %c1_i32_13 : i32
    %19 = arith.andi %17, %18 : i1
    %20 = arith.extui %19 : i1 to i32
    %c0_i32_14 = arith.constant 0 : i32
    %21 = arith.cmpi ne, %20, %c0_i32_14 : i32
    scf.if %21 {
      %c0_15 = arith.constant 0 : index
      %c0_16 = arith.constant 0 : index
      %22 = vector.load %arg10[%c0_15, %c0_16] : memref<8x1xf32, #tpu.memory_space<vmem>>, vector<8x1xf32>
      %c0_17 = arith.constant 0 : index
      %c0_18 = arith.constant 0 : index
      %23 = memref.load %arg7[%c0_17, %c0_18] : memref<1x1xf32, #tpu.memory_space<smem>>
      %24 = vector.broadcast %23 : f32 to vector<8x1xf32>
      %25 = arith.addf %22, %24 : vector<8x1xf32>
      %cst_19 = arith.constant 0.000000e+00 : f32
      %26 = vector.broadcast %cst_19 : f32 to vector<8x1xf32>
      %27 = arith.maximumf %25, %26 : vector<8x1xf32>
      %c0_20 = arith.constant 0 : index
      %c0_21 = arith.constant 0 : index
      %28 = vector.load %arg8[%c0_20, %c0_21] : memref<8x1xf32, #tpu.memory_space<vmem>>, vector<8x1xf32>
      tpu.vector_store %arg8[%c0_20, %c0_21], %27 {strides = array<i32>} : memref<8x1xf32, #tpu.memory_space<vmem>>, vector<8x1xf32>,
    } else {
    }
    return
  }
  func.func @transform_0(%arg0: i32, %arg1: i32, %arg2: i32) -> (i32, i32) {
    %c0_i32 = arith.constant 0 : i32
    return %arg0, %arg2 : i32, i32
  }
  func.func @transform_1(%arg0: i32, %arg1: i32, %arg2: i32) -> (i32, i32) {
    %c0_i32 = arith.constant 0 : i32
    return %arg2, %arg1 : i32, i32
  }
  func.func @transform_2(%arg0: i32, %arg1: i32, %arg2: i32) -> (i32, i32) {
    %c0_i32 = arith.constant 0 : i32
    %c0_i32_0 = arith.constant 0 : i32
    return %c0_i32, %arg1 : i32, i32
  }
  func.func @transform_3(%arg0: i32, %arg1: i32, %arg2: i32) -> (i32, i32) {
    %c0_i32 = arith.constant 0 : i32
    %c0_i32_0 = arith.constant 0 : i32
    return %c0_i32, %arg1 : i32, i32
  }
  func.func @transform_4(%arg0: i32, %arg1: i32, %arg2: i32) -> (i32, i32) {
    %c0_i32 = arith.constant 0 : i32
    %c0_i32_0 = arith.constant 0 : i32
    %c0_i32_1 = arith.constant 0 : i32
    return %c0_i32, %c0_i32_0 : i32, i32
  }
  func.func @transform_5(%arg0: i32, %arg1: i32, %arg2: i32) -> (i32, i32) {
    %c0_i32 = arith.constant 0 : i32
    %c0_i32_0 = arith.constant 0 : i32
    return %arg0, %c0_i32 : i32, i32
  }
}

</mosaic_0001>

<llo_original>
// kernel: tpu_custom_call.1
$region0: #{tpu_custom_call.1}
  #allocation0 [shape = 'u32[]', space=smem, size = 0x4, offset = 0x4, fixed_abs, tag = 'smem constant byte address 0x4 - core index']
  #allocation1 [shape = 'u32[72,128]{1,0:T(1,128)}', space=vmem, size = 0x9000, scoped, tag = 'internal scratch']
  #allocation2 [shape = 'f32[8,128]{1,0:T(8,128)}', space=vmem, size = 0x1000, scoped, tag = 'scratch operand']
  #allocation3 [shape = 'f32[8,1]{1,0:T(8,128)}', space=vmem, size = 0x1000, scoped, tag = 'scratch operand']
  #allocation4 [shape = 'f32[1,1]{1,0:T(1,128)S(6)}', space=smem, size = 0x200, scoped, tag = 'scoped memory for tpu_custom_call.1']
  %s0 = inlined_call_operand.hbm [shape: f32[8,256], index: 0, kind: input, shape index: {}]
  %s1 = inlined_call_operand.hbm [shape: f32[256,256], index: 1, kind: input, shape index: {}]
  %s2 = inlined_call_operand.vmem [shape: f32[1,256], index: 2, kind: input, shape index: {}]
  %s3 = inlined_call_operand.vmem [shape: f32[1,256], index: 3, kind: input, shape index: {}]
  %s4 = inlined_call_operand.<no memory space> [shape: f32[1,1], index: 4, kind: input, shape index: {}]
  %s5 = inlined_call_operand.vmem [shape: f32[8,1], index: 5, kind: output, shape index: {}]
  %s6 = sld [smem:[#allocation0]]
  $region77: #{tpu_custom_call.1} parent=0
    _
  %s8 = ssub.s32 1, %s6
  %s9 = scalar_select 0, %s8, %s6
  %10 = sst [smem:[#allocation4]] %s4
  $region1: #{tpu_custom_call.1} parent=0
    #allocation5 [shape = 'u8[8192]{0}', space=vmem, size = 0x2000, scoped, tag = 'input window, operand 0']
    #allocation6 [shape = 's32[2]{0}', space=sflag, size = 0x8, scoped, tag = 'scoped memory for tpu_custom_call.1']
    #allocation7 [shape = 'u8[131072]{0}', space=vmem, size = 0x20000, scoped, tag = 'input window, operand 1']
    #allocation8 [shape = 's32[2]{0}', space=sflag, size = 0x8, scoped, tag = 'scoped memory for tpu_custom_call.1']
    %11 = vsyncpa [#allocation6], 0
    %s12 = scalar_lea.sflag [#allocation6], 1
    %13 = vsyncpa %s12, 0
    %14 = vsyncpa [#allocation8], 0
    %s15 = scalar_lea.sflag [#allocation8], 1
    %16 = vsyncpa %s15, 0
    loop: start=0, step=1, limit=6
    $region2: #{tpu_custom_call.1} parent=1 // loop_pre_header
      _
    $region3: #{tpu_custom_call.1} parent=1 // loop_header
      %s18 = sphi 0, %s22
      %p19 = scmp.ge.s32.totalorder %s18, 6
      %s25 = sphi 0, %s44
      %s26 = sphi 0, %s40
      %s27 = sphi 0, %s36
      %s28 = sphi 0, %s25
      %s29 = sphi 0, %s26
      %s30 = sphi 0, %s27
      %s31 = sphi 0, %s28
      %s32 = sphi 0, %s29
      %s33 = sphi 0, %s30
      %s49 = sphi 0, %s51
      %s52 = sphi 0, %s49
      %s53 = sphi 0, %s52
      %s69 = sphi 0, %s53
      %s77 = sphi 0, %s79
      %s80 = sphi 0, %s77
      %s81 = sphi 0, %s80
      %s97 = sphi 0, %s81
      %s103 = sphi 0, %s105
      %s106 = sphi 0, %s103
      %s107 = sphi 0, %s106
      %s123 = sphi 0, %s107
      %s129 = sphi 0, %s131
      %s132 = sphi 0, %s129
      %s133 = sphi 0, %s132
      %s149 = sphi 0, %s133
      %s153 = sphi 0, %s153
      %s155 = sphi 0, %s153
      %s156 = sphi 0, %s155
      %s170 = sphi 0, %s156
      %s176 = sphi 0, %s178
      %s179 = sphi 0, %s176
      %s180 = sphi 0, %s179
      %s196 = sphi 0, %s180
    $region4: #{tpu_custom_call.1} parent=1 // loop_header_branch
      %21 = sbr.rel (%p19) target = $region8
    $region5: #{tpu_custom_call.1} parent=1 // loop_body
      %s23 = ssub.s32 %s18, 1
      %s24 = ssub.s32 %s18, 2
      %s34 = sadd.s32 1, %s27
      %p35 = scmp.ge.s32.totalorder %s34, 2
      %s36 = scalar_select %p35, 0, %s34
      %s37 = sadd.s32 1, %s26
      %s38 = scalar_select %p35, %s37, %s26
      %p39 = scmp.ge.s32.totalorder %s38, 2
      %s40 = scalar_select %p39, 0, %s38
      %s41 = sadd.s32 1, %s25
      %s42 = scalar_select %p39, %s41, %s25
      %p43 = scmp.ge.s32.totalorder %s42, 1
      %s44 = scalar_select %p43, 0, %s42
      %s45 = ssub.s32 %s25, %s44
      %s46 = ssub.s32 %s27, %s36
      %s47 = sor.u32 %s45, %s46
      %p48 = scmp.eq.s32.totalorder %s47, 0
      %s50 = sadd.s32 %s49, 1
      %s51 = scalar_select %p48, %s49, %s50
      %p54 = pneg %p48
      %p55 = scmp.eq.s32.totalorder %s18, 3
      %p56 = por %p54, %p55
      %p57 = scmp.ne.s32.totalorder %s49, %s52
      %p58 = scmp.eq.s32.totalorder %s18, 0
      %p59 = por %p57, %p58
      %p60 = scmp.ne.s32.totalorder %s49, %s52
      %p61 = scmp.eq.s32.totalorder %s23, 3
      %p62 = por %p60, %p61
      %p63 = scmp.ne.s32.totalorder %s52, %s53
      %p64 = scmp.eq.s32.totalorder %s23, 0
      %p65 = por %p63, %p64
      %p66 = scmp.ne.s32.totalorder %s52, %s53
      %p67 = scmp.eq.s32.totalorder %s24, 3
      %p68 = por %p66, %p67
      %p70 = scmp.ne.s32.totalorder %s53, %s69
      %p71 = scmp.eq.s32.totalorder %s24, 0
      %p72 = por %p70, %p71
      %s73 = ssub.s32 %s27, %s36
      %s74 = ssub.s32 %s26, %s40
      %s75 = sor.u32 %s73, %s74
      %p76 = scmp.eq.s32.totalorder %s75, 0
      %s78 = sadd.s32 %s77, 1
      %s79 = scalar_select %p76, %s77, %s78
      %p82 = pneg %p76
      %p83 = scmp.eq.s32.totalorder %s18, 3
      %p84 = por %p82, %p83
      %p85 = scmp.ne.s32.totalorder %s77, %s80
      %p86 = scmp.eq.s32.totalorder %s18, 0
      %p87 = por %p85, %p86
      %p88 = scmp.ne.s32.totalorder %s77, %s80
      %p89 = scmp.eq.s32.totalorder %s23, 3
      %p90 = por %p88, %p89
      %p91 = scmp.ne.s32.totalorder %s80, %s81
      %p92 = scmp.eq.s32.totalorder %s23, 0
      %p93 = por %p91, %p92
      %p94 = scmp.ne.s32.totalorder %s80, %s81
      %p95 = scmp.eq.s32.totalorder %s24, 3
      %p96 = por %p94, %p95
      %p98 = scmp.ne.s32.totalorder %s81, %s97
      %p99 = scmp.eq.s32.totalorder %s24, 0
      %p100 = por %p98, %p99
      %s101 = ssub.s32 %s26, %s40
      %p102 = scmp.eq.s32.totalorder %s101, 0
      %s104 = sadd.s32 %s103, 1
      %s105 = scalar_select %p102, %s103, %s104
      %p108 = pneg %p102
      %p109 = scmp.eq.s32.totalorder %s18, 3
      %p110 = por %p108, %p109
      %p111 = scmp.ne.s32.totalorder %s103, %s106
      %p112 = scmp.eq.s32.totalorder %s18, 0
      %p113 = por %p111, %p112
      %p114 = scmp.ne.s32.totalorder %s103, %s106
      %p115 = scmp.eq.s32.totalorder %s23, 3
      %p116 = por %p114, %p115
      %p117 = scmp.ne.s32.totalorder %s106, %s107
      %p118 = scmp.eq.s32.totalorder %s23, 0
      %p119 = por %p117, %p118
      %p120 = scmp.ne.s32.totalorder %s106, %s107
      %p121 = scmp.eq.s32.totalorder %s24, 3
      %p122 = por %p120, %p121
      %p124 = scmp.ne.s32.totalorder %s107, %s123
      %p125 = scmp.eq.s32.totalorder %s24, 0
      %p126 = por %p124, %p125
      %s127 = ssub.s32 %s26, %s40
      %p128 = scmp.eq.s32.totalorder %s127, 0
      %s130 = sadd.s32 %s129, 1
      %s131 = scalar_select %p128, %s129, %s130
      %p134 = pneg %p128
      %p135 = scmp.eq.s32.totalorder %s18, 3
      %p136 = por %p134, %p135
      %p137 = scmp.ne.s32.totalorder %s129, %s132
      %p138 = scmp.eq.s32.totalorder %s18, 0
      %p139 = por %p137, %p138
      %p140 = scmp.ne.s32.totalorder %s129, %s132
      %p141 = scmp.eq.s32.totalorder %s23, 3
      %p142 = por %p140, %p141
      %p143 = scmp.ne.s32.totalorder %s132, %s133
      %p144 = scmp.eq.s32.totalorder %s23, 0
      %p145 = por %p143, %p144
      %p146 = scmp.ne.s32.totalorder %s132, %s133
      %p147 = scmp.eq.s32.totalorder %s24, 3
      %p148 = por %p146, %p147
      %p150 = scmp.ne.s32.totalorder %s133, %s149
      %p151 = scmp.eq.s32.totalorder %s24, 0
      %p152 = por %p150, %p151
      %s154 = sadd.s32 %s153, 1
      %p157 = scmp.eq.s32.totalorder %s18, 3
      %p158 = scmp.ne.s32.totalorder %s153, %s155
      %p159 = scmp.eq.s32.totalorder %s18, 0
      %p160 = por %p158, %p159
      %p161 = scmp.ne.s32.totalorder %s153, %s155
      %p162 = scmp.eq.s32.totalorder %s23, 3
      %p163 = por %p161, %p162
      %p164 = scmp.ne.s32.totalorder %s155, %s156
      %p165 = scmp.eq.s32.totalorder %s23, 0
      %p166 = por %p164, %p165
      %p167 = scmp.ne.s32.totalorder %s155, %s156
      %p168 = scmp.eq.s32.totalorder %s24, 3
      %p169 = por %p167, %p168
      %p171 = scmp.ne.s32.totalorder %s156, %s170
      %p172 = scmp.eq.s32.totalorder %s24, 0
      %p173 = por %p171, %p172
      %s174 = ssub.s32 %s25, %s44
      %p175 = scmp.eq.s32.totalorder %s174, 0
      %s177 = sadd.s32 %s176, 1
      %s178 = scalar_select %p175, %s176, %s177
      %p181 = pneg %p175
      %p182 = scmp.eq.s32.totalorder %s18, 3
      %p183 = por %p181, %p182
      %p184 = scmp.ne.s32.totalorder %s176, %s179
      %p185 = scmp.eq.s32.totalorder %s18, 0
      %p186 = por %p184, %p185
      %p187 = scmp.ne.s32.totalorder %s176, %s179
      %p188 = scmp.eq.s32.totalorder %s23, 3
      %p189 = por %p187, %p188
      %p190 = scmp.ne.s32.totalorder %s179, %s180
      %p191 = scmp.eq.s32.totalorder %s23, 0
      %p192 = por %p190, %p191
      %p193 = scmp.ne.s32.totalorder %s179, %s180
      %p194 = scmp.eq.s32.totalorder %s24, 3
      %p195 = por %p193, %p194
      %p197 = scmp.ne.s32.totalorder %s180, %s196
      %p198 = scmp.eq.s32.totalorder %s24, 0
      %p199 = por %p197, %p198
      %p200 = scmp.le.s32.totalorder 1, %s18
      %p201 = scmp.lt.s32.totalorder %s18, 5
      %p202 = pnand %p200, %p201
      %p203 = pneg %p202
      // Predicated region
      $region9: #{tpu_custom_call.1} parent=5 // pred_check
        _
      $region10: #{tpu_custom_call.1} parent=5 // pred_check_branch
        %205 = sbr.rel (%p202) target = $region12
      $region11: #{tpu_custom_call.1} parent=5 // pred_region
        %s206 = ssub.s32 %s18, 1
        // Predicated region
        $region13: #{tpu_custom_call.1} parent=11 // pred_check
          %p207 = pneg %p166
        $region14: #{tpu_custom_call.1} parent=11 // pred_check_branch
          %209 = sbr.rel (%p207) target = $region16
        $region15: #{tpu_custom_call.1} parent=11 // pred_region
          _
        $region16: #{tpu_custom_call.1} parent=11 // pred_fallthru
          _
      $region12: #{tpu_custom_call.1} parent=5 // pred_fallthru
        _
      %p210 = scmp.lt.s32.totalorder %s18, 4
      // Predicated region
      $region17: #{tpu_custom_call.1} parent=5 // pred_check
        %p211 = pneg %p210
      $region18: #{tpu_custom_call.1} parent=5 // pred_check_branch
        %213 = sbr.rel (%p211) target = $region20
      $region19: #{tpu_custom_call.1} parent=5 // pred_region
        // Predicated region
        $region21: #{tpu_custom_call.1} parent=19 // pred_check
          %p214 = pneg %p59
        $region22: #{tpu_custom_call.1} parent=19 // pred_check_branch
          %216 = sbr.rel (%p214) target = $region24
        $region23: #{tpu_custom_call.1} parent=19 // pred_region
          %s217 = sand.u32 %s49, 1
          %s218 = scalar_lea.sflag [#allocation6], %s217
          %s219 = sand.u32 %s49, 1
          %s220 = smul.addr %s219, 8
          %s221 = scalar_lea.vmem [#allocation5], %s220
          %223 = vsyncadd %s218, 0
          %s224 = smul.addr %s25, 2
          %s225 = sadd.s32 %s27, %s224
          %s226 = smul.addr %s225, 8
          %s227 = scalar_lea.hbm %s0, %s226
          %s229 = sshll.u32 %s227, 4
          %s230 = int_to_ptr.hbm [resolvable:$true] %s229
          %s231 = sshll.u32 %s221, 4
          %s232 = int_to_ptr.vmem [resolvable:$true] %s231
          %234 = dma.hbm_to_vmem [thread:$0]  %s230, 128, %s232, %s218
        $region24: #{tpu_custom_call.1} parent=19 // pred_fallthru
          _
        // Predicated region
        $region25: #{tpu_custom_call.1} parent=19 // pred_check
          %p235 = pneg %p87
        $region26: #{tpu_custom_call.1} parent=19 // pred_check_branch
          %237 = sbr.rel (%p235) target = $region28
        $region27: #{tpu_custom_call.1} parent=19 // pred_region
          %s238 = sand.u32 %s77, 1
          %s239 = scalar_lea.sflag [#allocation8], %s238
          %s240 = sand.u32 %s77, 1
          %s241 = smul.addr %s240, 128
          %s242 = scalar_lea.vmem [#allocation7], %s241
          %s243 = smul.u32 16, %s27
          %245 = vsyncadd %s239, 0
          %s246 = smul.addr %s243, 2
          %s247 = sadd.s32 %s26, %s246
          %s248 = smul.addr %s247, 8
          %s249 = scalar_lea.hbm %s1, %s248
          %s250 = sshll.u32 %s249, 4
          %s251 = int_to_ptr.hbm [resolvable:$true] %s250
          %s252 = sshll.u32 %s242, 4
          %s253 = int_to_ptr.vmem [resolvable:$true] %s252
          %258 = dma.hbm_to_vmem [thread:$0]  %s251, 2048, %s253, %s239, 256, 128, 8
        $region28: #{tpu_custom_call.1} parent=19 // pred_fallthru
          _
        // Predicated region
        $region29: #{tpu_custom_call.1} parent=19 // pred_check
          %p259 = pneg %p113
        $region30: #{tpu_custom_call.1} parent=19 // pred_check_branch
          %261 = sbr.rel (%p259) target = $region32
        $region31: #{tpu_custom_call.1} parent=19 // pred_region
          %p262 = scmp.lt.s32.totalorder %s26, 1
          %s263 = scalar_select %p262, %s26, 1
          %s264 = scalar_lea.vmem %s2, %s263
        $region32: #{tpu_custom_call.1} parent=19 // pred_fallthru
          _
        // Predicated region
        $region33: #{tpu_custom_call.1} parent=19 // pred_check
          %p265 = pneg %p139
        $region34: #{tpu_custom_call.1} parent=19 // pred_check_branch
          %267 = sbr.rel (%p265) target = $region36
        $region35: #{tpu_custom_call.1} parent=19 // pred_region
          %p268 = scmp.lt.s32.totalorder %s26, 1
          %s269 = scalar_select %p268, %s26, 1
          %s270 = scalar_lea.vmem %s3, %s269
        $region36: #{tpu_custom_call.1} parent=19 // pred_fallthru
          _
      $region20: #{tpu_custom_call.1} parent=5 // pred_fallthru
        _
      %p271 = scmp.le.s32.totalorder 1, %s18
      %p272 = scmp.lt.s32.totalorder %s18, 5
      %p273 = pnand %p271, %p272
      %p274 = pneg %p273
      // Predicated region
      $region37: #{tpu_custom_call.1} parent=5 // pred_check
        _
      $region38: #{tpu_custom_call.1} parent=5 // pred_check_branch
        %276 = sbr.rel (%p273) target = $region40
      $region39: #{tpu_custom_call.1} parent=5 // pred_region
        %s277 = ssub.s32 %s18, 1
        %s278 = sand.u32 %s52, 1
        %s279 = scalar_lea.sflag [#allocation6], %s278
        %s280 = sand.u32 %s52, 1
        %s281 = smul.addr %s280, 8
        %s282 = scalar_lea.vmem [#allocation5], %s281
        // Predicated region
        $region41: #{tpu_custom_call.1} parent=39 // pred_check
          %p283 = pneg %p65
        $region42: #{tpu_custom_call.1} parent=39 // pred_check_branch
          %285 = sbr.rel (%p283) target = $region44
        $region43: #{tpu_custom_call.1} parent=39 // pred_region
          %287 = dma.done %s279, 128
        $region44: #{tpu_custom_call.1} parent=39 // pred_fallthru
          _
        %s288 = sand.u32 %s80, 1
        %s289 = scalar_lea.sflag [#allocation8], %s288
        %s290 = sand.u32 %s80, 1
        %s291 = smul.addr %s290, 128
        %s292 = scalar_lea.vmem [#allocation7], %s291
        // Predicated region
        $region45: #{tpu_custom_call.1} parent=39 // pred_check
          %p293 = pneg %p93
        $region46: #{tpu_custom_call.1} parent=39 // pred_check_branch
          %295 = sbr.rel (%p293) target = $region48
        $region47: #{tpu_custom_call.1} parent=39 // pred_region
          %297 = dma.done %s289, 2048
        $region48: #{tpu_custom_call.1} parent=39 // pred_fallthru
          _
        %s298 = sand.u32 %s52, 1
        %s299 = scalar_lea.sflag [#allocation6], %s298
        %s300 = sand.u32 %s52, 1
        %s301 = smul.addr %s300, 8
        %s302 = scalar_lea.vmem [#allocation5], %s301
        %p303 = pneg %p65
        %p304 = pneg %p62
        %s305 = sand.u32 %s80, 1
        %s306 = scalar_lea.sflag [#allocation8], %s305
        %s307 = sand.u32 %s80, 1
        %s308 = smul.addr %s307, 128
        %s309 = scalar_lea.vmem [#allocation7], %s308
        %p310 = pneg %p93
        %p311 = pneg %p90
        %p312 = scmp.lt.s32.totalorder %s29, 1
        %s313 = scalar_select %p312, %s29, 1
        %s314 = scalar_lea.vmem %s2, %s313
        %p315 = pneg %p119
        %p316 = pneg %p116
        %p317 = scmp.lt.s32.totalorder %s29, 1
        %s318 = scalar_select %p317, %s29, 1
        %s319 = scalar_lea.vmem %s3, %s318
        %p320 = pneg %p145
        %p321 = pneg %p142
        %p322 = pneg %p166
        %p323 = pneg %p163
        %p324 = pneg %p192
        %p325 = pneg %p189
        %p326 = scmp.lt.s32.totalorder %s28, 0
        %s327 = scalar_select %p326, %s28, 0
        %s328 = smul.addr %s327, 8
        %s329 = scalar_lea.vmem %s5, %s328
        %s330 = smul.u32 16, %s30
        %p331 = scmp.lt.s32.totalorder %s29, 1
        %s332 = scalar_select %p331, %s29, 1
        %s333 = scalar_lea.vmem %s2, %s332
        %p334 = scmp.lt.s32.totalorder %s29, 1
        %s335 = scalar_select %p334, %s29, 1
        %s336 = scalar_lea.vmem %s3, %s335
        %p337 = scmp.lt.s32.totalorder %s28, 0
        %s338 = scalar_select %p337, %s28, 0
        %s339 = smul.addr %s338, 8
        %s340 = scalar_lea.vmem %s5, %s339
        %p341 = scmp.eq.s32.totalorder %s29, 0
        %p342 = scmp.eq.s32.totalorder %s30, 0
        %p343 = pnand %p341, %p342
        %p344 = pneg %p343
        // Predicated region
        $region49: #{tpu_custom_call.1} parent=39 // pred_check
          _
        $region50: #{tpu_custom_call.1} parent=39 // pred_check_branch
          %346 = sbr.rel (%p343) target = $region52
        $region51: #{tpu_custom_call.1} parent=39 // pred_region
          %vm347 = vcmask 7168
          %348 = vst.msk [vmem:[#allocation3] sm:$0xff] %vm347, 0.0
        $region52: #{tpu_custom_call.1} parent=39 // pred_fallthru
          _
        // Predicated region
        $region53: #{tpu_custom_call.1} parent=39 // pred_check
          %p349 = pneg %p342
        $region54: #{tpu_custom_call.1} parent=39 // pred_check_branch
          %351 = sbr.rel (%p349) target = $region56
        $region55: #{tpu_custom_call.1} parent=39 // pred_region
          %352 = vst [vmem:[#allocation2] sm:$0xff] 0.0
        $region56: #{tpu_custom_call.1} parent=39 // pred_fallthru
          _
        %v353 = vld [vmem:[#allocation2] sm:$0xff]
        %v354 = vld [vmem:[%s282] sm:$0xff]
        %v355 = vld [vmem:[%s292] sm:$0xff]
        %v356 = vld [vmem:[%s292 + $0x8] sm:$0xff]
        %v357 = vld [vmem:[%s292 + $0x10] sm:$0xff]
        %v358 = vld [vmem:[%s292 + $0x18] sm:$0xff]
        %v359 = vld [vmem:[%s292 + $0x20] sm:$0xff]
        %v360 = vld [vmem:[%s292 + $0x28] sm:$0xff]
        %v361 = vld [vmem:[%s292 + $0x30] sm:$0xff]
        %v362 = vld [vmem:[%s292 + $0x38] sm:$0xff]
        %v363 = vld [vmem:[%s292 + $0x40] sm:$0xff]
        %v364 = vld [vmem:[%s292 + $0x48] sm:$0xff]
        %v365 = vld [vmem:[%s292 + $0x50] sm:$0xff]
        %v366 = vld [vmem:[%s292 + $0x58] sm:$0xff]
        %v367 = vld [vmem:[%s292 + $0x60] sm:$0xff]
        %v368 = vld [vmem:[%s292 + $0x68] sm:$0xff]
        %v369 = vld [vmem:[%s292 + $0x70] sm:$0xff]
        %v370 = vld [vmem:[%s292 + $0x78] sm:$0xff]
        %371 = vmatpush.msra.mxu0 %v370
        %372 = vmatpush.msra.mxu0 %v369
        %373 = vmatpush.msra.mxu0 %v368
        %374 = vmatpush.msra.mxu0 %v367
        %375 = vmatpush.msra.mxu0 %v366
        %376 = vmatpush.msra.mxu0 %v365
        %377 = vmatpush.msra.mxu0 %v364
        %378 = vmatpush.msra.mxu0 %v363
        %379 = vmatpush.msra.mxu0 %v362
        %380 = vmatpush.msra.mxu0 %v361
        %381 = vmatpush.msra.mxu0 %v360
        %382 = vmatpush.msra.mxu0 %v359
        %383 = vmatpush.msra.mxu0 %v358
        %384 = vmatpush.msra.mxu0 %v357
        %385 = vmatpush.msra.mxu0 %v356
        %386 = vmatpush.msra.mxu0 %v355
        %387 = vmatmul.f32.gmra.mxu0 %v354
        %v388 = vpop.f32.mrf.mxu0
        %v389 = vadd.f32 0.0, %v388
        %390 = vdwg.mxu0
        %v391 = vadd.f32 %v353, %v389
        %392 = vst [vmem:[#allocation2] sm:$0xff] %v391
        %p393 = scmp.eq.s32.totalorder %s30, 1
        // Predicated region
        $region57: #{tpu_custom_call.1} parent=39 // pred_check
          %p394 = pneg %p393
        $region58: #{tpu_custom_call.1} parent=39 // pred_check_branch
          %396 = sbr.rel (%p394) target = $region60
        $region59: #{tpu_custom_call.1} parent=39 // pred_region
          %v397 = vld [vmem:[#allocation2] sm:$0xff]
          %v398 = vld [vmem:[%s333] sm:$0x1]
          %v400 = vperm.slane %v398, 0
          %v402 = vadd.f32 %v397, %v400
          %v403 = vmax.f32 %v402, 0.0
          %v404 = vld [vmem:[#allocation3] sm:$0xff]
          %v405 = vld [vmem:[%s336] sm:$0x1]
          %v407 = vperm.slane %v405, 0
          %v409 = vmul.f32 %v403, %v407
          %410 = vadd.xlane.f32.xlu0 %v409
          %v411 = vpop.xlane.xlu0 %410
          %v412 = vadd.f32 %v404, %v411
          %vm413 = vcmask 7168
          %414 = vst.msk [vmem:[#allocation3] sm:$0xff] %vm413, %v412
        $region60: #{tpu_custom_call.1} parent=39 // pred_fallthru
          _
        %p415 = scmp.eq.s32.totalorder %s29, 1
        %p416 = pnand %p415, %p393
        %p417 = pneg %p416
        // Predicated region
        $region61: #{tpu_custom_call.1} parent=39 // pred_check
          _
        $region62: #{tpu_custom_call.1} parent=39 // pred_check_branch
          %419 = sbr.rel (%p416) target = $region64
        $region63: #{tpu_custom_call.1} parent=39 // pred_region
          %v420 = vld [vmem:[#allocation3] sm:$0xff]
          %s421 = sld [smem:[#allocation4]]
          %v422 = vstv %s421
          %v423 = vadd.f32 %v420, %v422
          %v424 = vmax.f32 %v423, 0.0
          %vm425 = vcmask 7168
          %426 = vst.msk [vmem:[%s340] sm:$0xff] %vm425, %v424
        $region64: #{tpu_custom_call.1} parent=39 // pred_fallthru
          _
        %p427 = scmp.lt.s32.totalorder %s28, 0
        %s428 = scalar_select %p427, %s28, 0
        %s429 = smul.addr %s428, 8
        %s430 = scalar_lea.vmem %s5, %s429
        // Predicated region
        $region65: #{tpu_custom_call.1} parent=39 // pred_check
          %p431 = pneg %p189
        $region66: #{tpu_custom_call.1} parent=39 // pred_check_branch
          %433 = sbr.rel (%p431) target = $region68
        $region67: #{tpu_custom_call.1} parent=39 // pred_region
          _
        $region68: #{tpu_custom_call.1} parent=39 // pred_fallthru
          _
        // Predicated region
        $region69: #{tpu_custom_call.1} parent=39 // pred_check
          %p434 = pneg %p189
        $region70: #{tpu_custom_call.1} parent=39 // pred_check_branch
          %436 = sbr.rel (%p434) target = $region72
        $region71: #{tpu_custom_call.1} parent=39 // pred_region
          %p437 = scmp.lt.s32.totalorder %s28, 0
          %s438 = scalar_select %p437, %s28, 0
          %s439 = smul.addr %s438, 8
          %s440 = scalar_lea.vmem %s5, %s439
        $region72: #{tpu_custom_call.1} parent=39 // pred_fallthru
          _
      $region40: #{tpu_custom_call.1} parent=5 // pred_fallthru
        _
      %p441 = scmp.le.s32.totalorder 2, %s18
      // Predicated region
      $region73: #{tpu_custom_call.1} parent=5 // pred_check
        %p442 = pneg %p441
      $region74: #{tpu_custom_call.1} parent=5 // pred_check_branch
        %444 = sbr.rel (%p442) target = $region76
      $region75: #{tpu_custom_call.1} parent=5 // pred_region
        %s445 = ssub.s32 %s18, 2
      $region76: #{tpu_custom_call.1} parent=5 // pred_fallthru
        _
    $region6: #{tpu_custom_call.1} parent=1 // loop_footer
      %s22 = sadd.s32 1, %s18
    $region7: #{tpu_custom_call.1} parent=1 // loop_footer_branch
      %17 = sbr.rel target = $region3
    $region8: #{tpu_custom_call.1} parent=1 // loop_exit
      _
    %446 = vsyncpa [#allocation6], 1
    %s447 = scalar_lea.sflag [#allocation6], 1
    %448 = vsyncpa %s447, 1
    %449 = vsyncpa [#allocation8], 1
    %s450 = scalar_lea.sflag [#allocation8], 1
    %451 = vsyncpa %s450, 1

</llo_original>
